<compile_context>
chip_gen: v5e
topology: v5e:2x2
jax: 0.10.0
libtpu: 0.0.40
codegen_flags: <defaults>
</compile_context>

<pallas_src>
import functools

import jax
import jax.numpy as jnp
from jax import lax
from jax.experimental import pallas as pl
from jax.experimental.pallas import tpu as pltpu

K = 3  # conv kernel size (k=3 in the module)


def _spatial_attention_kernel(w_ref, x_ref, o_ref, *, BT, C, H, W, CHUNK,
                              gate_dtype):
    # w_ref: SMEM (2*K*K,) flattened conv weights, order [in_ch, ky, kx]
    # x_ref: VMEM (BT, C, H*W) BT batch elements, lane-dense folded spatial axis
    # o_ref: VMEM (BT, C, H*W)
    HW = H * W
    PAD = (K - 1) // 2
    n_full = C // CHUNK
    rem = C - n_full * CHUNK

    # ---- pass 1: chunked channel reductions (max + f32 sum in one pass) -----
    if n_full == 0:
        # C < CHUNK: a single static read covers all channels.
        xc = x_ref[:, pl.ds(0, C), :]                                # (BT,C,HW)
        x_max = jnp.max(xc, axis=1).astype(jnp.float32)              # (BT,HW)
        x_sum = jnp.sum(xc, axis=1, dtype=jnp.float32)               # (BT,HW)
    else:
        def red_body(i, carry):
            m, s = carry
            c0 = pl.multiple_of(i * CHUNK, CHUNK)
            xc = x_ref[:, pl.ds(c0, CHUNK), :]                       # (BT,CHUNK,HW)
            m = jnp.maximum(m, jnp.max(xc, axis=1).astype(jnp.float32))
            s = s + jnp.sum(xc, axis=1, dtype=jnp.float32)
            return m, s

        init = (jnp.full((BT, HW), -jnp.inf, jnp.float32),
                jnp.zeros((BT, HW), jnp.float32))
        x_max, x_sum = lax.fori_loop(0, n_full, red_body, init)
        if rem > 0:  # static tail chunk
            xc = x_ref[:, pl.ds(n_full * CHUNK, rem), :]
            x_max = jnp.maximum(x_max, jnp.max(xc, axis=1).astype(jnp.float32))
            x_sum = x_sum + jnp.sum(xc, axis=1, dtype=jnp.float32)

    x_avg = x_sum * jnp.float32(1.0 / C)                             # (BT,HW)

    # ---- hoist the 2*K*K conv weights out of SMEM into scalars --------------
    w = [w_ref[i] for i in range(2 * K * K)]

    # ---- border masks on the folded HW axis ----------------------------------
    flat = lax.broadcasted_iota(jnp.int32, (1, HW), 1)
    col = flat % W
    col_ok = {-1: col >= 1, 0: None, 1: col <= (W - 2)}
    row_ok = {-1: flat >= W, 0: None, 1: flat < (HW - W)}

    # ---- 3x3 conv over the two pooled maps: lane rolls (XLU) + masks ---------
    acc = jnp.zeros((BT, HW), jnp.float32)
    for ky in range(K):
        oy = ky - PAD
        for kx in range(K):
            ox = kx - PAD
            w_max = w[0 * K * K + ky * K + kx]
            w_avg = w[1 * K * K + ky * K + kx]
            # Combine the pooled maps with this tap's weights first, then roll
            # once per tap (roll is linear, weights are scalars).
            combo = w_max * x_max + w_avg * x_avg                    # (BT,HW)
            s_off = oy * W + ox                                      # flat offset
            if s_off != 0:
                # shifted[i] = combo[i + s_off]  (jnp.roll convention)
                combo = pltpu.roll(combo, (-s_off) % HW, axis=1)
            valid = None
            for msk in (row_ok[oy], col_ok[ox]):
                if msk is not None:
                    valid = msk if valid is None else (valid & msk)
            if valid is not None:
                combo = jnp.where(valid, combo, 0.0)                 # zero padding
            acc = acc + combo

    # ---- gate (EUP sigmoid), cast once, broadcast hoisted once ---------------
    gate = jax.nn.sigmoid(acc).astype(gate_dtype)                    # (BT,HW)
    gate3 = gate[:, None, :]                                         # (BT,1,HW)

    # ---- pass 2: chunked gated multiply --------------------------------------
    if n_full > 0:
        gate_b = jnp.broadcast_to(gate3, (BT, CHUNK, HW))            # hoisted

        def app_body(i, carry):
            c0 = pl.multiple_of(i * CHUNK, CHUNK)
            xc = x_ref[:, pl.ds(c0, CHUNK), :]
            o_ref[:, pl.ds(c0, CHUNK), :] = (xc * gate_b).astype(o_ref.dtype)
            return carry

        lax.fori_loop(0, n_full, app_body, 0)
    if rem > 0:
        c0 = n_full * CHUNK
        xc = x_ref[:, pl.ds(c0, rem), :]
        o_ref[:, pl.ds(c0, rem), :] = (xc * gate3).astype(o_ref.dtype)


def spatial_attention(x, conv_w):
    """x: (B, C, H, W); conv_w: (1, 2, K, K) (PyTorch Conv2d weight layout)."""
    B, C, H, W = x.shape
    HW = H * W
    dt = x.dtype
    itemsize = dt.itemsize
    sub = max(8, 32 // itemsize)            # sublane tile: f32->8, bf16->16
    lane = 128
    Cp = -(-C // sub) * sub                 # padded VMEM extents
    HWp = -(-HW // lane) * lane
    pb = Cp * HWp * itemsize                # padded per-batch block bytes

    # --- generation-aware VMEM budget (v5e/v6e: 128 MiB, v7x: 64 MiB) --------
    vmem_cap = 64 << 20                     # conservative default (v7x)
    try:
        info = pltpu.get_tpu_info()
        vmem_cap = int(getattr(info, "vmem_capacity_bytes", vmem_cap))
    except Exception:
        pass
    budget = (vmem_cap * 3) // 4            # headroom for compiler scratch

    # --- batch-tile: fold several batches per grid step for tiny slabs -------
    target_block = max(pb, min(1 << 20, budget // 8))
    BT = 1
    for d in range(B, 0, -1):
        if B % d == 0 and d * pb <= target_block:
            BT = d
            break

    CHUNK = sub                             # one sublane tile per chunked read

    # --- VMEM limit: 2x-buffered in + out blocks + f32 temporaries -----------
    block_bytes = BT * pb
    f32_tmp = BT * HWp * 4 * (6 + 2 * CHUNK)
    need = 4 * block_bytes + f32_tmp + (4 << 20)
    vmem_limit = int(max(32 << 20, min(need, budget)))
    # TODO(synk): when a single-batch slab exceeds `budget`, tile C/HW (with a
    # 1-row conv halo) instead of clamping.

    x_flat = x.reshape(B, C, HW)                       # lane-dense folded layout
    w_flat = conv_w.reshape(-1).astype(jnp.float32)    # (2*K*K,)

    gate_dtype = jnp.bfloat16 if dt == jnp.bfloat16 else jnp.float32

    kernel = functools.partial(_spatial_attention_kernel, BT=BT, C=C, H=H, W=W,
                               CHUNK=CHUNK, gate_dtype=gate_dtype)

    out_flat = pl.pallas_call(
        kernel,
        out_shape=jax.ShapeDtypeStruct((B, C, HW), dt),
        grid=(B // BT,),
        in_specs=[
            pl.BlockSpec(memory_space=pltpu.SMEM),                  # conv weights
            pl.BlockSpec((BT, C, HW), lambda b: (b, 0, 0)),         # x batch-tile
        ],
        out_specs=pl.BlockSpec((BT, C, HW), lambda b: (b, 0, 0)),
        compiler_params=pltpu.CompilerParams(
            dimension_semantics=("parallel",),
            vmem_limit_bytes=vmem_limit,
        ),
    )(w_flat, x_flat)
    return out_flat.reshape(B, C, H, W)


def spatial_attention_ref(x, conv_w):
    """Plain-JAX reference replicating the PyTorch forward."""
    x_max = jnp.max(x, axis=1, keepdims=True)
    x_avg = jnp.mean(x, axis=1, keepdims=True)
    x_att = jnp.concatenate([x_max, x_avg], axis=1)        # (B, 2, H, W)
    att = lax.conv_general_dilated(
        x_att, conv_w, window_strides=(1, 1),
        padding=[((K - 1) // 2, (K - 1) // 2)] * 2,
        dimension_numbers=("NCHW", "OIHW", "NCHW"))
    return x * jax.nn.sigmoid(att)


if __name__ == "__main__":
    B, C, H, W = 2, 4, 16, 16
    key = jax.random.PRNGKey(0)
    kx, kw = jax.random.split(key)

    x = jax.random.normal(kx, (B, C, H, W), dtype=jnp.float32)

    # Deterministic Conv2d(2, 1, k=3, bias=False) weight init (kaiming-uniform-ish).
    fan_in = 2 * K * K
    bound = 1.0 / jnp.sqrt(float(fan_in))
    conv_w = jax.random.uniform(kw, (1, 2, K, K), dtype=jnp.float32,
                                minval=-bound, maxval=bound)

    out = spatial_attention(x, conv_w)
    out = jax.block_until_ready(out)

    ref = spatial_attention_ref(x, conv_w)
    assert out.shape == (B, C, H, W)
    assert jnp.allclose(out, ref, atol=1e-5, rtol=1e-5), "mismatch vs reference"

    print("KERNEL_OK")
</pallas_src>

<mosaic_0001>
module attributes {stable_mosaic.version = 11 : i64} {
  func.func @_spatial_attention_kernel(%arg0: i32, %arg1: memref<18xf32, #tpu.memory_space<smem>>, %arg2: memref<2x4x256xf32, #tpu.memory_space<vmem>>, %arg3: memref<2x4x256xf32, #tpu.memory_space<vmem>>) attributes {dimension_semantics = [#tpu.dimension_semantics<parallel>], iteration_bounds = array<i64: 1>, scalar_prefetch = 0 : i64, scratch_operands = 0 : i64, tpu.core_type = #tpu.core_type<tc>, window_params = [{transform_indices = @transform_0, window_bounds = array<i64: 18>}, {transform_indices = @transform_1, window_bounds = array<i64: 2, 4, 256>}, {transform_indices = @transform_2, window_bounds = array<i64: 2, 4, 256>}]} {
    %c0 = arith.constant 0 : index
    %c0_0 = arith.constant 0 : index
    %c0_1 = arith.constant 0 : index
    %0 = vector.load %arg2[%c0, %c0_0, %c0_1] : memref<2x4x256xf32, #tpu.memory_space<vmem>>, vector<2x4x256xf32>
    %cst = arith.constant dense<0xFF800000> : vector<2x256xf32>
    %1 = vector.multi_reduction <maximumf>, %0, %cst [1] : vector<2x4x256xf32> to vector<2x256xf32>
    %cst_2 = arith.constant dense<0.000000e+00> : vector<2x256xf32>
    %2 = vector.multi_reduction <add>, %0, %cst_2 [1] : vector<2x4x256xf32> to vector<2x256xf32>
    %cst_3 = arith.constant 2.500000e-01 : f32
    %3 = vector.broadcast %cst_3 : f32 to vector<2x256xf32>
    %4 = arith.mulf %2, %3 : vector<2x256xf32>
    %c0_4 = arith.constant 0 : index
    %5 = memref.load %arg1[%c0_4] : memref<18xf32, #tpu.memory_space<smem>>
    %c1 = arith.constant 1 : index
    %6 = memref.load %arg1[%c1] : memref<18xf32, #tpu.memory_space<smem>>
    %c2 = arith.constant 2 : index
    %7 = memref.load %arg1[%c2] : memref<18xf32, #tpu.memory_space<smem>>
    %c3 = arith.constant 3 : index
    %8 = memref.load %arg1[%c3] : memref<18xf32, #tpu.memory_space<smem>>
    %c4 = arith.constant 4 : index
    %9 = memref.load %arg1[%c4] : memref<18xf32, #tpu.memory_space<smem>>
    %c5 = arith.constant 5 : index
    %10 = memref.load %arg1[%c5] : memref<18xf32, #tpu.memory_space<smem>>
    %c6 = arith.constant 6 : index
    %11 = memref.load %arg1[%c6] : memref<18xf32, #tpu.memory_space<smem>>
    %c7 = arith.constant 7 : index
    %12 = memref.load %arg1[%c7] : memref<18xf32, #tpu.memory_space<smem>>
    %c8 = arith.constant 8 : index
    %13 = memref.load %arg1[%c8] : memref<18xf32, #tpu.memory_space<smem>>
    %c9 = arith.constant 9 : index
    %14 = memref.load %arg1[%c9] : memref<18xf32, #tpu.memory_space<smem>>
    %c10 = arith.constant 10 : index
    %15 = memref.load %arg1[%c10] : memref<18xf32, #tpu.memory_space<smem>>
    %c11 = arith.constant 11 : index
    %16 = memref.load %arg1[%c11] : memref<18xf32, #tpu.memory_space<smem>>
    %c12 = arith.constant 12 : index
    %17 = memref.load %arg1[%c12] : memref<18xf32, #tpu.memory_space<smem>>
    %c13 = arith.constant 13 : index
    %18 = memref.load %arg1[%c13] : memref<18xf32, #tpu.memory_space<smem>>
    %c14 = arith.constant 14 : index
    %19 = memref.load %arg1[%c14] : memref<18xf32, #tpu.memory_space<smem>>
    %c15 = arith.constant 15 : index
    %20 = memref.load %arg1[%c15] : memref<18xf32, #tpu.memory_space<smem>>
    %c16 = arith.constant 16 : index
    %21 = memref.load %arg1[%c16] : memref<18xf32, #tpu.memory_space<smem>>
    %c17 = arith.constant 17 : index
    %22 = memref.load %arg1[%c17] : memref<18xf32, #tpu.memory_space<smem>>
    %23 = tpu.iota {dimensions = array<i32: 1>} : vector<1x256xi32>
    %c16_i32 = arith.constant 16 : i32
    %c0_i32 = arith.constant 0 : i32
    %24 = arith.cmpi eq, %c16_i32, %c0_i32 : i32
    %c1_i32 = arith.constant 1 : i32
    %25 = arith.select %24, %c1_i32, %c16_i32 : i32
    %26 = vector.broadcast %25 : i32 to vector<1x256xi32>
    %27 = arith.remsi %23, %26 : vector<1x256xi32>
    %c0_i32_5 = arith.constant 0 : i32
    %28 = vector.broadcast %c0_i32_5 : i32 to vector<1x256xi32>
    %29 = arith.cmpi ne, %27, %28 : vector<1x256xi32>
    %c0_i32_6 = arith.constant 0 : i32
    %30 = vector.broadcast %c0_i32_6 : i32 to vector<1x256xi32>
    %31 = arith.cmpi slt, %27, %30 : vector<1x256xi32>
    %c0_i32_7 = arith.constant 0 : i32
    %32 = arith.cmpi slt, %25, %c0_i32_7 : i32
    %33 = vector.broadcast %32 : i1 to vector<1x256xi1>
    %34 = vector.broadcast %33 : vector<1x256xi1> to vector<1x256xi1>
    %35 = arith.xori %31, %34 : vector<1x256xi1>
    %36 = arith.andi %35, %29 : vector<1x256xi1>
    %37 = vector.broadcast %25 : i32 to vector<1x256xi32>
    %38 = arith.addi %27, %37 : vector<1x256xi32>
    %39 = arith.select %36, %38, %27 : vector<1x256xi1>, vector<1x256xi32>
    %c1_i32_8 = arith.constant 1 : i32
    %40 = vector.broadcast %c1_i32_8 : i32 to vector<1x256xi32>
    %41 = arith.cmpi sge, %39, %40 : vector<1x256xi32>
    %c14_i32 = arith.constant 14 : i32
    %42 = vector.broadcast %c14_i32 : i32 to vector<1x256xi32>
    %43 = arith.cmpi sle, %39, %42 : vector<1x256xi32>
    %c16_i32_9 = arith.constant 16 : i32
    %44 = vector.broadcast %c16_i32_9 : i32 to vector<1x256xi32>
    %45 = arith.cmpi sge, %23, %44 : vector<1x256xi32>
    %c240_i32 = arith.constant 240 : i32
    %46 = vector.broadcast %c240_i32 : i32 to vector<1x256xi32>
    %47 = arith.cmpi slt, %23, %46 : vector<1x256xi32>
    %cst_10 = arith.constant 0.000000e+00 : f32
    %48 = vector.broadcast %cst_10 : f32 to vector<2x256xf32>
    %49 = vector.broadcast %5 : f32 to vector<2x256xf32>
    %50 = arith.mulf %49, %1 : vector<2x256xf32>
    %51 = vector.broadcast %14 : f32 to vector<2x256xf32>
    %52 = arith.mulf %51, %4 : vector<2x256xf32>
    %53 = arith.addf %50, %52 : vector<2x256xf32>
    %c17_i32 = arith.constant 17 : i32
    %54 = tpu.dynamic_rotate %53 by %c17_i32 dim 1 : vector<2x256xf32>, i32 -> vector<2x256xf32>
    %55 = arith.andi %45, %41 : vector<1x256xi1>
    %cst_11 = arith.constant 0.000000e+00 : f32
    %56 = vector.shape_cast %55 : vector<1x256xi1> to vector<1x256xi1>
    %57 = vector.broadcast %56 : vector<1x256xi1> to vector<2x256xi1>
    %58 = vector.broadcast %cst_11 : f32 to vector<2x256xf32>
    %59 = arith.select %57, %54, %58 : vector<2x256xi1>, vector<2x256xf32>
    %60 = arith.addf %48, %59 : vector<2x256xf32>
    %61 = vector.broadcast %6 : f32 to vector<2x256xf32>
    %62 = arith.mulf %61, %1 : vector<2x256xf32>
    %63 = vector.broadcast %15 : f32 to vector<2x256xf32>
    %64 = arith.mulf %63, %4 : vector<2x256xf32>
    %65 = arith.addf %62, %64 : vector<2x256xf32>
    %c16_i32_12 = arith.constant 16 : i32
    %66 = tpu.dynamic_rotate %65 by %c16_i32_12 dim 1 : vector<2x256xf32>, i32 -> vector<2x256xf32>
    %cst_13 = arith.constant 0.000000e+00 : f32
    %67 = vector.shape_cast %45 : vector<1x256xi1> to vector<1x256xi1>
    %68 = vector.broadcast %67 : vector<1x256xi1> to vector<2x256xi1>
    %69 = vector.broadcast %cst_13 : f32 to vector<2x256xf32>
    %70 = arith.select %68, %66, %69 : vector<2x256xi1>, vector<2x256xf32>
    %71 = arith.addf %60, %70 : vector<2x256xf32>
    %72 = vector.broadcast %7 : f32 to vector<2x256xf32>
    %73 = arith.mulf %72, %1 : vector<2x256xf32>
    %74 = vector.broadcast %16 : f32 to vector<2x256xf32>
    %75 = arith.mulf %74, %4 : vector<2x256xf32>
    %76 = arith.addf %73, %75 : vector<2x256xf32>
    %c15_i32 = arith.constant 15 : i32
    %77 = tpu.dynamic_rotate %76 by %c15_i32 dim 1 : vector<2x256xf32>, i32 -> vector<2x256xf32>
    %78 = arith.andi %45, %43 : vector<1x256xi1>
    %cst_14 = arith.constant 0.000000e+00 : f32
    %79 = vector.shape_cast %78 : vector<1x256xi1> to vector<1x256xi1>
    %80 = vector.broadcast %79 : vector<1x256xi1> to vector<2x256xi1>
    %81 = vector.broadcast %cst_14 : f32 to vector<2x256xf32>
    %82 = arith.select %80, %77, %81 : vector<2x256xi1>, vector<2x256xf32>
    %83 = arith.addf %71, %82 : vector<2x256xf32>
    %84 = vector.broadcast %8 : f32 to vector<2x256xf32>
    %85 = arith.mulf %84, %1 : vector<2x256xf32>
    %86 = vector.broadcast %17 : f32 to vector<2x256xf32>
    %87 = arith.mulf %86, %4 : vector<2x256xf32>
    %88 = arith.addf %85, %87 : vector<2x256xf32>
    %c1_i32_15 = arith.constant 1 : i32
    %89 = tpu.dynamic_rotate %88 by %c1_i32_15 dim 1 : vector<2x256xf32>, i32 -> vector<2x256xf32>
    %cst_16 = arith.constant 0.000000e+00 : f32
    %90 = vector.shape_cast %41 : vector<1x256xi1> to vector<1x256xi1>
    %91 = vector.broadcast %90 : vector<1x256xi1> to vector<2x256xi1>
    %92 = vector.broadcast %cst_16 : f32 to vector<2x256xf32>
    %93 = arith.select %91, %89, %92 : vector<2x256xi1>, vector<2x256xf32>
    %94 = arith.addf %83, %93 : vector<2x256xf32>
    %95 = vector.broadcast %9 : f32 to vector<2x256xf32>
    %96 = arith.mulf %95, %1 : vector<2x256xf32>
    %97 = vector.broadcast %18 : f32 to vector<2x256xf32>
    %98 = arith.mulf %97, %4 : vector<2x256xf32>
    %99 = arith.addf %96, %98 : vector<2x256xf32>
    %100 = arith.addf %94, %99 : vector<2x256xf32>
    %101 = vector.broadcast %10 : f32 to vector<2x256xf32>
    %102 = arith.mulf %101, %1 : vector<2x256xf32>
    %103 = vector.broadcast %19 : f32 to vector<2x256xf32>
    %104 = arith.mulf %103, %4 : vector<2x256xf32>
    %105 = arith.addf %102, %104 : vector<2x256xf32>
    %c255_i32 = arith.constant 255 : i32
    %106 = tpu.dynamic_rotate %105 by %c255_i32 dim 1 : vector<2x256xf32>, i32 -> vector<2x256xf32>
    %cst_17 = arith.constant 0.000000e+00 : f32
    %107 = vector.shape_cast %43 : vector<1x256xi1> to vector<1x256xi1>
    %108 = vector.broadcast %107 : vector<1x256xi1> to vector<2x256xi1>
    %109 = vector.broadcast %cst_17 : f32 to vector<2x256xf32>
    %110 = arith.select %108, %106, %109 : vector<2x256xi1>, vector<2x256xf32>
    %111 = arith.addf %100, %110 : vector<2x256xf32>
    %112 = vector.broadcast %11 : f32 to vector<2x256xf32>
    %113 = arith.mulf %112, %1 : vector<2x256xf32>
    %114 = vector.broadcast %20 : f32 to vector<2x256xf32>
    %115 = arith.mulf %114, %4 : vector<2x256xf32>
    %116 = arith.addf %113, %115 : vector<2x256xf32>
    %c241_i32 = arith.constant 241 : i32
    %117 = tpu.dynamic_rotate %116 by %c241_i32 dim 1 : vector<2x256xf32>, i32 -> vector<2x256xf32>
    %118 = arith.andi %47, %41 : vector<1x256xi1>
    %cst_18 = arith.constant 0.000000e+00 : f32
    %119 = vector.shape_cast %118 : vector<1x256xi1> to vector<1x256xi1>
    %120 = vector.broadcast %119 : vector<1x256xi1> to vector<2x256xi1>
    %121 = vector.broadcast %cst_18 : f32 to vector<2x256xf32>
    %122 = arith.select %120, %117, %121 : vector<2x256xi1>, vector<2x256xf32>
    %123 = arith.addf %111, %122 : vector<2x256xf32>
    %124 = vector.broadcast %12 : f32 to vector<2x256xf32>
    %125 = arith.mulf %124, %1 : vector<2x256xf32>
    %126 = vector.broadcast %21 : f32 to vector<2x256xf32>
    %127 = arith.mulf %126, %4 : vector<2x256xf32>
    %128 = arith.addf %125, %127 : vector<2x256xf32>
    %c240_i32_19 = arith.constant 240 : i32
    %129 = tpu.dynamic_rotate %128 by %c240_i32_19 dim 1 : vector<2x256xf32>, i32 -> vector<2x256xf32>
    %cst_20 = arith.constant 0.000000e+00 : f32
    %130 = vector.shape_cast %47 : vector<1x256xi1> to vector<1x256xi1>
    %131 = vector.broadcast %130 : vector<1x256xi1> to vector<2x256xi1>
    %132 = vector.broadcast %cst_20 : f32 to vector<2x256xf32>
    %133 = arith.select %131, %129, %132 : vector<2x256xi1>, vector<2x256xf32>
    %134 = arith.addf %123, %133 : vector<2x256xf32>
    %135 = vector.broadcast %13 : f32 to vector<2x256xf32>
    %136 = arith.mulf %135, %1 : vector<2x256xf32>
    %137 = vector.broadcast %22 : f32 to vector<2x256xf32>
    %138 = arith.mulf %137, %4 : vector<2x256xf32>
    %139 = arith.addf %136, %138 : vector<2x256xf32>
    %c239_i32 = arith.constant 239 : i32
    %140 = tpu.dynamic_rotate %139 by %c239_i32 dim 1 : vector<2x256xf32>, i32 -> vector<2x256xf32>
    %141 = arith.andi %47, %43 : vector<1x256xi1>
    %cst_21 = arith.constant 0.000000e+00 : f32
    %142 = vector.shape_cast %141 : vector<1x256xi1> to vector<1x256xi1>
    %143 = vector.broadcast %142 : vector<1x256xi1> to vector<2x256xi1>
    %144 = vector.broadcast %cst_21 : f32 to vector<2x256xf32>
    %145 = arith.select %143, %140, %144 : vector<2x256xi1>, vector<2x256xf32>
    %146 = arith.addf %134, %145 : vector<2x256xf32>
    %147 = arith.negf %146 : vector<2x256xf32>
    %148 = math.exp %147 : vector<2x256xf32>
    %cst_22 = arith.constant 1.000000e+00 : f32
    %149 = vector.broadcast %cst_22 : f32 to vector<2x256xf32>
    %150 = arith.addf %149, %148 : vector<2x256xf32>
    %151 = arith.divf %149, %150 : vector<2x256xf32>
    %152 = vector.shape_cast %151 : vector<2x256xf32> to vector<2x1x256xf32>
    %c0_23 = arith.constant 0 : index
    %c0_24 = arith.constant 0 : index
    %c0_25 = arith.constant 0 : index
    %153 = vector.load %arg2[%c0_23, %c0_24, %c0_25] : memref<2x4x256xf32, #tpu.memory_space<vmem>>, vector<2x4x256xf32>
    %154 = vector.broadcast %152 : vector<2x1x256xf32> to vector<2x4x256xf32>
    %155 = arith.mulf %153, %154 : vector<2x4x256xf32>
    %c0_26 = arith.constant 0 : index
    %c0_27 = arith.constant 0 : index
    %c0_28 = arith.constant 0 : index
    %156 = vector.load %arg3[%c0_26, %c0_27, %c0_28] : memref<2x4x256xf32, #tpu.memory_space<vmem>>, vector<2x4x256xf32>
    tpu.vector_store %arg3[%c0_26, %c0_27, %c0_28], %155 {strides = array<i32>} : memref<2x4x256xf32, #tpu.memory_space<vmem>>, vector<2x4x256xf32>,
    return
  }
  func.func @transform_0(%arg0: i32) -> i32 {
    %c0_i32 = arith.constant 0 : i32
    %c0_i32_0 = arith.constant 0 : i32
    return %c0_i32 : i32
  }
  func.func @transform_1(%arg0: i32) -> (i32, i32, i32) {
    %c0_i32 = arith.constant 0 : i32
    %c0_i32_0 = arith.constant 0 : i32
    %c0_i32_1 = arith.constant 0 : i32
    return %arg0, %c0_i32, %c0_i32_0 : i32, i32, i32
  }
  func.func @transform_2(%arg0: i32) -> (i32, i32, i32) {
    %c0_i32 = arith.constant 0 : i32
    %c0_i32_0 = arith.constant 0 : i32
    %c0_i32_1 = arith.constant 0 : i32
    return %arg0, %c0_i32, %c0_i32_0 : i32, i32, i32
  }
}

</mosaic_0001>

<llo_original>
// kernel: tpu_custom_call.1
$region0: #{tpu_custom_call.1}
  #allocation0 [shape = 'u32[]', space=smem, size = 0x4, offset = 0x4, fixed_abs, tag = 'smem constant byte address 0x4 - core index']
  #allocation1 [shape = 'u32[72,128]{1,0:T(1,128)}', space=vmem, size = 0x9000, scoped, tag = 'internal scratch']
  %s0 = inlined_call_operand.hbm [shape: f32[18], index: 0, kind: input, shape index: {}]
  %s1 = inlined_call_operand.hbm [shape: f32[2,4,256], index: 1, kind: input, shape index: {}]
  %s2 = inlined_call_operand.hbm [shape: f32[2,4,256], index: 2, kind: output, shape index: {}]
  %s3 = sld [smem:[#allocation0]]
  $region26: #{tpu_custom_call.1} parent=0
    _
  %s5 = ssub.s32 1, %s3
  %s6 = scalar_select 0, %s5, %s3
  $region1: #{tpu_custom_call.1} parent=0
    #allocation2 [shape = 'u8[512]{0}', space=smem, size = 0x200, scoped, tag = 'input window, operand 0, single buffered']
    #allocation3 [shape = 's32[1]{0}', space=sflag, size = 0x4, scoped, tag = 'scoped memory for tpu_custom_call.1']
    #allocation4 [shape = 's32[1]{0}', space=sflag, size = 0x4, scoped, tag = 'scoped memory for tpu_custom_call.1']
    #allocation5 [shape = 's32[1]{0}', space=sflag, size = 0x4, scoped, tag = 'scoped memory for tpu_custom_call.1']
    #allocation6 [shape = 'u8[8192]{0}', space=vmem, size = 0x2000, scoped, tag = 'input window, operand 1, single buffered']
    #allocation7 [shape = 'u8[8192]{0}', space=vmem, size = 0x2000, scoped, tag = 'output window, operand 0, single buffered']
    %7 = vsyncpa [#allocation5], 0
    %8 = vsyncpa [#allocation3], 0
    %9 = vsyncpa [#allocation4], 0
    // Predicated region
    $region2: #{tpu_custom_call.1} parent=1 // pred_check
      _
    $region3: #{tpu_custom_call.1} parent=1 // pred_check_branch
      %11 = sbr.rel (0) target = $region5
    $region4: #{tpu_custom_call.1} parent=1 // pred_region
      %13 = vsyncadd [#allocation5], 0
      %s15 = sshll.u32 %s0, 4
      %s16 = int_to_ptr.hbm [resolvable:$true] %s15
      %18 = dma.hbm_to_smem %s16, 16, [#allocation2], [#allocation5]
    $region5: #{tpu_custom_call.1} parent=1 // pred_fallthru
      _
    // Predicated region
    $region6: #{tpu_custom_call.1} parent=1 // pred_check
      _
    $region7: #{tpu_custom_call.1} parent=1 // pred_check_branch
      %20 = sbr.rel (0) target = $region9
    $region8: #{tpu_custom_call.1} parent=1 // pred_region
      %22 = vsyncadd [#allocation3], 0
      %s23 = sshll.u32 %s1, 4
      %s24 = int_to_ptr.hbm [resolvable:$true] %s23
      %s25 = sshll.u32 [#allocation6], 4
      %s26 = int_to_ptr.vmem [resolvable:$true] %s25
      %31 = dma.hbm_to_vmem [thread:$0]  %s24, 256, %s26, [#allocation3], 128, 128, 8
    $region9: #{tpu_custom_call.1} parent=1 // pred_fallthru
      _
    // Predicated region
    $region10: #{tpu_custom_call.1} parent=1 // pred_check
      _
    $region11: #{tpu_custom_call.1} parent=1 // pred_check_branch
      %33 = sbr.rel (0) target = $region13
    $region12: #{tpu_custom_call.1} parent=1 // pred_region
      %35 = dma.done [#allocation5], 16
    $region13: #{tpu_custom_call.1} parent=1 // pred_fallthru
      _
    // Predicated region
    $region14: #{tpu_custom_call.1} parent=1 // pred_check
      _
    $region15: #{tpu_custom_call.1} parent=1 // pred_check_branch
      %37 = sbr.rel (0) target = $region17
    $region16: #{tpu_custom_call.1} parent=1 // pred_region
      %39 = dma.done [#allocation3], 256
    $region17: #{tpu_custom_call.1} parent=1 // pred_fallthru
      _
    %40 = sfence
    %v41 = vld [vmem:[#allocation6] sm:$0xff]
    %v42 = vld [vmem:[#allocation6 + $0x8] sm:$0xff]
    %45 = vst [vmem:[#allocation1] ss:$2 sm:$0xff] %v41
    %v46 = vld.sshfl [vmem:[#allocation1] sm:$0xff pattern:$0x75316420]
    %v47 = vld.sshfl [vmem:[#allocation1 + $0x8] sm:$0xff pattern:$0x75316420]
    %s48 = scalar_lea.vmem [#allocation1], 16
    %49 = vst [vmem:[%s48] ss:$2 sm:$0xff] %v42
    %v50 = vld.sshfl [vmem:[#allocation1 + $0x10] sm:$0xff pattern:$0x75316420]
    %v51 = vld.sshfl [vmem:[#allocation1 + $0x18] sm:$0xff pattern:$0x75316420]
    %vm56 = vcmask 1043456
    %v57 = vsel %vm56, %v46, -inf
    %v58 = vrot.slane %v57, 4
    %v59 = vmax.f32 %v57, %v58
    %v60 = vrot.slane %v59, 2
    %v61 = vmax.f32 %v59, %v60
    %v62 = vrot.slane %v61, 1
    %v63 = vmax.f32 %v61, %v62
    %v64 = vsel %vm56, %v47, -inf
    %v65 = vrot.slane %v64, 4
    %v66 = vmax.f32 %v64, %v65
    %v67 = vrot.slane %v66, 2
    %v68 = vmax.f32 %v66, %v67
    %v69 = vrot.slane %v68, 1
    %v70 = vmax.f32 %v68, %v69
    %v71 = vsel %vm56, %v50, -inf
    %v72 = vrot.slane %v71, 4
    %v73 = vmax.f32 %v71, %v72
    %v74 = vrot.slane %v73, 2
    %v75 = vmax.f32 %v73, %v74
    %v76 = vrot.slane %v75, 1
    %v77 = vmax.f32 %v75, %v76
    %v78 = vsel %vm56, %v51, -inf
    %v79 = vrot.slane %v78, 4
    %v80 = vmax.f32 %v78, %v79
    %v81 = vrot.slane %v80, 2
    %v82 = vmax.f32 %v80, %v81
    %v83 = vrot.slane %v82, 1
    %v84 = vmax.f32 %v82, %v83
    %85 = vst [vmem:[#allocation1] ss:$2 sm:$0xff] %v41
    %v86 = vld.sshfl [vmem:[#allocation1] sm:$0xff pattern:$0x75316420]
    %v87 = vld.sshfl [vmem:[#allocation1 + $0x8] sm:$0xff pattern:$0x75316420]
    %s88 = scalar_lea.vmem [#allocation1], 16
    %89 = vst [vmem:[%s88] ss:$2 sm:$0xff] %v42
    %v90 = vld.sshfl [vmem:[#allocation1 + $0x10] sm:$0xff pattern:$0x75316420]
    %v91 = vld.sshfl [vmem:[#allocation1 + $0x18] sm:$0xff pattern:$0x75316420]
    %v96 = vsel %vm56, %v86, 0.0
    %v97 = vrot.slane %v96, 4
    %v98 = vadd.f32 %v96, %v97
    %v99 = vrot.slane %v98, 2
    %v100 = vadd.f32 %v98, %v99
    %v101 = vrot.slane %v100, 1
    %v102 = vadd.f32 %v100, %v101
    %v103 = vsel %vm56, %v87, 0.0
    %v104 = vrot.slane %v103, 4
    %v105 = vadd.f32 %v103, %v104
    %v106 = vrot.slane %v105, 2
    %v107 = vadd.f32 %v105, %v106
    %v108 = vrot.slane %v107, 1
    %v109 = vadd.f32 %v107, %v108
    %v110 = vsel %vm56, %v90, 0.0
    %v111 = vrot.slane %v110, 4
    %v112 = vadd.f32 %v110, %v111
    %v113 = vrot.slane %v112, 2
    %v114 = vadd.f32 %v112, %v113
    %v115 = vrot.slane %v114, 1
    %v116 = vadd.f32 %v114, %v115
    %v117 = vsel %vm56, %v91, 0.0
    %v118 = vrot.slane %v117, 4
    %v119 = vadd.f32 %v117, %v118
    %v120 = vrot.slane %v119, 2
    %v121 = vadd.f32 %v119, %v120
    %v122 = vrot.slane %v121, 1
    %v123 = vadd.f32 %v121, %v122
    %v124 = vmul.f32 %v102, 0.25
    %v125 = vmul.f32 %v109, 0.25
    %v126 = vmul.f32 %v116, 0.25
    %v127 = vmul.f32 %v123, 0.25
    %s128 = sld [smem:[#allocation2]]
    %s129 = sld [smem:[#allocation2 + $0x1]]
    %s130 = sld [smem:[#allocation2 + $0x2]]
    %s131 = sld [smem:[#allocation2 + $0x3]]
    %s132 = sld [smem:[#allocation2 + $0x4]]
    %s133 = sld [smem:[#allocation2 + $0x5]]
    %s134 = sld [smem:[#allocation2 + $0x6]]
    %s135 = sld [smem:[#allocation2 + $0x7]]
    %s136 = sld [smem:[#allocation2 + $0x8]]
    %s137 = sld [smem:[#allocation2 + $0x9]]
    %s138 = sld [smem:[#allocation2 + $0xa]]
    %s139 = sld [smem:[#allocation2 + $0xb]]
    %s140 = sld [smem:[#allocation2 + $0xc]]
    %s141 = sld [smem:[#allocation2 + $0xd]]
    %s142 = sld [smem:[#allocation2 + $0xe]]
    %s143 = sld [smem:[#allocation2 + $0xf]]
    %s144 = sld [smem:[#allocation2 + $0x10]]
    %s145 = sld [smem:[#allocation2 + $0x11]]
    %v146 = vlaneseq
    %v147 = vand.u32 %v146, 127
    %v148 = vadd.s32 %v147, 128
    %vm149 = vcmp.lt.s32.totalorder %v147, 0
    %v150 = vsub.s32 0, %v147
    %v151 = vsel %vm149, %v150, %v147
    %v152 = vshrl.u32 %v151, 4
    %v153 = vand.u32 %v151, 15
    %v154 = vsub.s32 0, %v153
    %v155 = vsel %vm149, %v154, %v153
    %vm156 = vcmp.lt.s32.totalorder %v148, 0
    %v157 = vsub.s32 0, %v148
    %v158 = vsel %vm156, %v157, %v148
    %v159 = vshrl.u32 %v158, 4
    %v160 = vand.u32 %v158, 15
    %v161 = vsub.s32 0, %v160
    %v162 = vsel %vm156, %v161, %v160
    %vm163 = vcmp.ne.s32.totalorder %v155, 0
    %vm164 = vcmp.ne.s32.totalorder %v162, 0
    %vm165 = vcmp.lt.s32.totalorder %v155, 0
    %vm166 = vcmp.lt.s32.totalorder %v162, 0
    %vm167 = vmand %vm165, %vm163
    %vm168 = vmand %vm166, %vm164
    %v169 = vadd.s32 %v155, 16
    %v170 = vadd.s32 %v162, 16
    %v171 = vsel %vm167, %v169, %v155
    %v172 = vsel %vm168, %v170, %v162
    %vm173 = vcmp.ge.s32.totalorder %v171, 1
    %vm174 = vcmp.ge.s32.totalorder %v172, 1
    %vm175 = vcmp.le.s32.totalorder %v171, 14
    %vm176 = vcmp.le.s32.totalorder %v172, 14
    %vm177 = vcmp.ge.s32.totalorder %v147, 16
    %vm178 = vcmp.ge.s32.totalorder %v148, 16
    %vm179 = vcmp.lt.s32.totalorder %v147, 240
    %vm180 = vcmp.lt.s32.totalorder %v148, 240
    %v181 = vstv %s128
    %v182 = vmul.f32 %v181, %v63
    %v183 = vmul.f32 %v181, %v70
    %v184 = vmul.f32 %v181, %v77
    %v185 = vmul.f32 %v181, %v84
    %v186 = vstv %s137
    %v187 = vmul.f32 %v186, %v124
    %v188 = vmul.f32 %v186, %v125
    %v189 = vmul.f32 %v186, %v126
    %v190 = vmul.f32 %v186, %v127
    %v191 = vadd.f32 %v182, %v187
    %v192 = vadd.f32 %v183, %v188
    %v193 = vadd.f32 %v184, %v189
    %v194 = vadd.f32 %v185, %v190
    %vm199 = vcmask 1041409
    %v200 = vsel %vm199, %v193, %v191
    %v201 = vsel %vm199, %v194, %v192
    %204 = vrot.lane.b32.xlu0 %v200, 17
    %v205 = vpop.permute.xlu0 %204
    %206 = vrot.lane.b32.xlu0 %v201, 17
    %v207 = vpop.permute.xlu0 %206
    %vm208 = vcmp.lt.s32.totalorder %v147, 17
    %v209 = vsel %vm208, %v205, %v207
    %v210 = vsel %vm208, %v207, %v205
    %vm211 = vmand %vm177, %vm173
    %vm212 = vmand %vm178, %vm174
    %v213 = vsel %vm211, 1, 0
    %v214 = vsel %vm212, 1, 0
    %vm215 = vcmp.eq.s32.totalorder %v213, 1
    %vm216 = vcmp.eq.s32.totalorder %v214, 1
    %v217 = vsel %vm215, %v210, 0.0
    %v218 = vsel %vm216, %v209, 0.0
    %v219 = vadd.f32 %v217, 0.0
    %v220 = vadd.f32 %v218, 0.0
    %v221 = vstv %s129
    %v222 = vmul.f32 %v221, %v63
    %v223 = vmul.f32 %v221, %v70
    %v224 = vmul.f32 %v221, %v77
    %v225 = vmul.f32 %v221, %v84
    %v226 = vstv %s138
    %v227 = vmul.f32 %v226, %v124
    %v228 = vmul.f32 %v226, %v125
    %v229 = vmul.f32 %v226, %v126
    %v230 = vmul.f32 %v226, %v127
    %v231 = vadd.f32 %v222, %v227
    %v232 = vadd.f32 %v223, %v228
    %v233 = vadd.f32 %v224, %v229
    %v234 = vadd.f32 %v225, %v230
    %v239 = vsel %vm199, %v233, %v231
    %v240 = vsel %vm199, %v234, %v232
    %243 = vrot.lane.b32.xlu0 %v239, 16
    %v244 = vpop.permute.xlu0 %243
    %245 = vrot.lane.b32.xlu0 %v240, 16
    %v246 = vpop.permute.xlu0 %245
    %vm247 = vcmp.lt.s32.totalorder %v147, 16
    %v248 = vsel %vm247, %v244, %v246
    %v249 = vsel %vm247, %v246, %v244
    %v250 = vsel %vm177, 1, 0
    %v251 = vsel %vm178, 1, 0
    %vm252 = vcmp.eq.s32.totalorder %v250, 1
    %vm253 = vcmp.eq.s32.totalorder %v251, 1
    %v254 = vsel %vm252, %v249, 0.0
    %v255 = vsel %vm253, %v248, 0.0
    %v256 = vadd.f32 %v219, %v254
    %v257 = vadd.f32 %v220, %v255
    %v258 = vstv %s130
    %v259 = vmul.f32 %v258, %v63
    %v260 = vmul.f32 %v258, %v70
    %v261 = vmul.f32 %v258, %v77
    %v262 = vmul.f32 %v258, %v84
    %v263 = vstv %s139
    %v264 = vmul.f32 %v263, %v124
    %v265 = vmul.f32 %v263, %v125
    %v266 = vmul.f32 %v263, %v126
    %v267 = vmul.f32 %v263, %v127
    %v268 = vadd.f32 %v259, %v264
    %v269 = vadd.f32 %v260, %v265
    %v270 = vadd.f32 %v261, %v266
    %v271 = vadd.f32 %v262, %v267
    %v276 = vsel %vm199, %v270, %v268
    %v277 = vsel %vm199, %v271, %v269
    %280 = vrot.lane.b32.xlu0 %v276, 15
    %v281 = vpop.permute.xlu0 %280
    %282 = vrot.lane.b32.xlu0 %v277, 15
    %v283 = vpop.permute.xlu0 %282
    %vm284 = vcmp.lt.s32.totalorder %v147, 15
    %v285 = vsel %vm284, %v281, %v283
    %v286 = vsel %vm284, %v283, %v281
    %vm287 = vmand %vm177, %vm175
    %vm288 = vmand %vm178, %vm176
    %v289 = vsel %vm287, 1, 0
    %v290 = vsel %vm288, 1, 0
    %vm291 = vcmp.eq.s32.totalorder %v289, 1
    %vm292 = vcmp.eq.s32.totalorder %v290, 1
    %v293 = vsel %vm291, %v286, 0.0
    %v294 = vsel %vm292, %v285, 0.0
    %v295 = vadd.f32 %v256, %v293
    %v296 = vadd.f32 %v257, %v294
    %v297 = vstv %s131
    %v298 = vmul.f32 %v297, %v63
    %v299 = vmul.f32 %v297, %v70
    %v300 = vmul.f32 %v297, %v77
    %v301 = vmul.f32 %v297, %v84
    %v302 = vstv %s140
    %v303 = vmul.f32 %v302, %v124
    %v304 = vmul.f32 %v302, %v125
    %v305 = vmul.f32 %v302, %v126
    %v306 = vmul.f32 %v302, %v127
    %v307 = vadd.f32 %v298, %v303
    %v308 = vadd.f32 %v299, %v304
    %v309 = vadd.f32 %v300, %v305
    %v310 = vadd.f32 %v301, %v306
    %v315 = vsel %vm199, %v309, %v307
    %v316 = vsel %vm199, %v310, %v308
    %319 = vrot.lane.b32.xlu0 %v315, 1
    %v320 = vpop.permute.xlu0 %319
    %321 = vrot.lane.b32.xlu0 %v316, 1
    %v322 = vpop.permute.xlu0 %321
    %vm323 = vcmp.lt.s32.totalorder %v147, 1
    %v324 = vsel %vm323, %v320, %v322
    %v325 = vsel %vm323, %v322, %v320
    %v326 = vsel %vm173, 1, 0
    %v327 = vsel %vm174, 1, 0
    %vm328 = vcmp.eq.s32.totalorder %v326, 1
    %vm329 = vcmp.eq.s32.totalorder %v327, 1
    %v330 = vsel %vm328, %v325, 0.0
    %v331 = vsel %vm329, %v324, 0.0
    %v332 = vadd.f32 %v295, %v330
    %v333 = vadd.f32 %v296, %v331
    %v334 = vstv %s132
    %v335 = vmul.f32 %v334, %v63
    %v336 = vmul.f32 %v334, %v70
    %v337 = vmul.f32 %v334, %v77
    %v338 = vmul.f32 %v334, %v84
    %v339 = vstv %s141
    %v340 = vmul.f32 %v339, %v124
    %v341 = vmul.f32 %v339, %v125
    %v342 = vmul.f32 %v339, %v126
    %v343 = vmul.f32 %v339, %v127
    %v344 = vadd.f32 %v335, %v340
    %v345 = vadd.f32 %v336, %v341
    %v346 = vadd.f32 %v337, %v342
    %v347 = vadd.f32 %v338, %v343
    %v352 = vsel %vm199, %v346, %v344
    %v353 = vsel %vm199, %v347, %v345
    %v356 = vadd.f32 %v332, %v352
    %v357 = vadd.f32 %v333, %v353
    %v358 = vstv %s133
    %v359 = vmul.f32 %v358, %v63
    %v360 = vmul.f32 %v358, %v70
    %v361 = vmul.f32 %v358, %v77
    %v362 = vmul.f32 %v358, %v84
    %v363 = vstv %s142
    %v364 = vmul.f32 %v363, %v124
    %v365 = vmul.f32 %v363, %v125
    %v366 = vmul.f32 %v363, %v126
    %v367 = vmul.f32 %v363, %v127
    %v368 = vadd.f32 %v359, %v364
    %v369 = vadd.f32 %v360, %v365
    %v370 = vadd.f32 %v361, %v366
    %v371 = vadd.f32 %v362, %v367
    %v376 = vsel %vm199, %v370, %v368
    %v377 = vsel %vm199, %v371, %v369
    %380 = vrot.lane.b32.xlu0 %v376, 127
    %v381 = vpop.permute.xlu0 %380
    %382 = vrot.lane.b32.xlu0 %v377, 127
    %v383 = vpop.permute.xlu0 %382
    %vm384 = vcmp.lt.s32.totalorder %v147, 127
    %v385 = vsel %vm384, %v381, %v383
    %v386 = vsel %vm384, %v383, %v381
    %v387 = vsel %vm175, 1, 0
    %v388 = vsel %vm176, 1, 0
    %vm389 = vcmp.eq.s32.totalorder %v387, 1
    %vm390 = vcmp.eq.s32.totalorder %v388, 1
    %v391 = vsel %vm389, %v385, 0.0
    %v392 = vsel %vm390, %v386, 0.0
    %v393 = vadd.f32 %v356, %v391
    %v394 = vadd.f32 %v357, %v392
    %v395 = vstv %s134
    %v396 = vmul.f32 %v395, %v63
    %v397 = vmul.f32 %v395, %v70
    %v398 = vmul.f32 %v395, %v77
    %v399 = vmul.f32 %v395, %v84
    %v400 = vstv %s143
    %v401 = vmul.f32 %v400, %v124
    %v402 = vmul.f32 %v400, %v125
    %v403 = vmul.f32 %v400, %v126
    %v404 = vmul.f32 %v400, %v127
    %v405 = vadd.f32 %v396, %v401
    %v406 = vadd.f32 %v397, %v402
    %v407 = vadd.f32 %v398, %v403
    %v408 = vadd.f32 %v399, %v404
    %v413 = vsel %vm199, %v407, %v405
    %v414 = vsel %vm199, %v408, %v406
    %417 = vrot.lane.b32.xlu0 %v413, 113
    %v418 = vpop.permute.xlu0 %417
    %419 = vrot.lane.b32.xlu0 %v414, 113
    %v420 = vpop.permute.xlu0 %419
    %vm421 = vcmp.lt.s32.totalorder %v147, 113
    %v422 = vsel %vm421, %v418, %v420
    %v423 = vsel %vm421, %v420, %v418
    %vm424 = vmand %vm179, %vm173
    %vm425 = vmand %vm180, %vm174
    %v426 = vsel %vm424, 1, 0
    %v427 = vsel %vm425, 1, 0
    %vm428 = vcmp.eq.s32.totalorder %v426, 1
    %vm429 = vcmp.eq.s32.totalorder %v427, 1
    %v430 = vsel %vm428, %v422, 0.0
    %v431 = vsel %vm429, %v423, 0.0
    %v432 = vadd.f32 %v393, %v430
    %v433 = vadd.f32 %v394, %v431
    %v434 = vstv %s135
    %v435 = vmul.f32 %v434, %v63
    %v436 = vmul.f32 %v434, %v70
    %v437 = vmul.f32 %v434, %v77
    %v438 = vmul.f32 %v434, %v84
    %v439 = vstv %s144
    %v440 = vmul.f32 %v439, %v124
    %v441 = vmul.f32 %v439, %v125
    %v442 = vmul.f32 %v439, %v126
    %v443 = vmul.f32 %v439, %v127
    %v444 = vadd.f32 %v435, %v440
    %v445 = vadd.f32 %v436, %v441
    %v446 = vadd.f32 %v437, %v442
    %v447 = vadd.f32 %v438, %v443
    %v452 = vsel %vm199, %v446, %v444
    %v453 = vsel %vm199, %v447, %v445
    %456 = vrot.lane.b32.xlu0 %v452, 112
    %v457 = vpop.permute.xlu0 %456
    %458 = vrot.lane.b32.xlu0 %v453, 112
    %v459 = vpop.permute.xlu0 %458
    %vm460 = vcmp.lt.s32.totalorder %v147, 112
    %v461 = vsel %vm460, %v457, %v459
    %v462 = vsel %vm460, %v459, %v457
    %v463 = vsel %vm179, 1, 0
    %v464 = vsel %vm180, 1, 0
    %vm465 = vcmp.eq.s32.totalorder %v463, 1
    %vm466 = vcmp.eq.s32.totalorder %v464, 1
    %v467 = vsel %vm465, %v461, 0.0
    %v468 = vsel %vm466, %v462, 0.0
    %v469 = vadd.f32 %v432, %v467
    %v470 = vadd.f32 %v433, %v468
    %v471 = vstv %s136
    %v472 = vmul.f32 %v471, %v63
    %v473 = vmul.f32 %v471, %v70
    %v474 = vmul.f32 %v471, %v77
    %v475 = vmul.f32 %v471, %v84
    %v476 = vstv %s145
    %v477 = vmul.f32 %v476, %v124
    %v478 = vmul.f32 %v476, %v125
    %v479 = vmul.f32 %v476, %v126
    %v480 = vmul.f32 %v476, %v127
    %v481 = vadd.f32 %v472, %v477
    %v482 = vadd.f32 %v473, %v478
    %v483 = vadd.f32 %v474, %v479
    %v484 = vadd.f32 %v475, %v480
    %v489 = vsel %vm199, %v483, %v481
    %v490 = vsel %vm199, %v484, %v482
    %493 = vrot.lane.b32.xlu0 %v489, 111
    %v494 = vpop.permute.xlu0 %493
    %495 = vrot.lane.b32.xlu0 %v490, 111
    %v496 = vpop.permute.xlu0 %495
    %vm497 = vcmp.lt.s32.totalorder %v147, 111
    %v498 = vsel %vm497, %v494, %v496
    %v499 = vsel %vm497, %v496, %v494
    %vm500 = vmand %vm179, %vm175
    %vm501 = vmand %vm180, %vm176
    %v502 = vsel %vm500, 1, 0
    %v503 = vsel %vm501, 1, 0
    %vm504 = vcmp.eq.s32.totalorder %v502, 1
    %vm505 = vcmp.eq.s32.totalorder %v503, 1
    %v506 = vsel %vm504, %v498, 0.0
    %v507 = vsel %vm505, %v499, 0.0
    %v508 = vadd.f32 %v469, %v506
    %v509 = vadd.f32 %v470, %v507
    %v510 = vxor.u32 %v508, 2147483648
    %v511 = vxor.u32 %v509, 2147483648
    %v512 = vmul.f32 %v510, 1.442695
    %v513 = vpow.pop %v512
    %v514 = vmul.f32 %v511, 1.442695
    %v515 = vpow.pop %v514
    %v516 = vadd.f32 %v513, 1.0
    %v517 = vadd.f32 %v515, 1.0
    %v518 = vrcp.pop %v516
    %v519 = vmul.f32 %v516, %v518
    %v520 = vsub.f32 1.0, %v519
    %v521 = vmul.f32 %v518, %v520
    %v522 = vadd.f32 %v518, %v521
    %vm523 = vweird.f32 %v516
    %vm524 = vweird.f32 %v518
    %vm525 = vmor %vm523, %vm524
    %v526 = vsel %vm525, %v518, %v522
    %v527 = vand.u32 2147483647, %v516
    %vm528 = vcmp.eq.f32.partialorder %v527, 8.507059e+37
    %v529 = vand.u32 %v516, 2147483648
    %v530 = vor.u32 1.1754944e-38, %v529
    %v531 = vsel %vm528, %v530, %v526
    %v532 = vmul.f32 1.0, %v531
    %v533 = vrcp.pop %v517
    %v534 = vmul.f32 %v517, %v533
    %v535 = vsub.f32 1.0, %v534
    %v536 = vmul.f32 %v533, %v535
    %v537 = vadd.f32 %v533, %v536
    %vm538 = vweird.f32 %v517
    %vm539 = vweird.f32 %v533
    %vm540 = vmor %vm538, %vm539
    %v541 = vsel %vm540, %v533, %v537
    %v542 = vand.u32 2147483647, %v517
    %vm543 = vcmp.eq.f32.partialorder %v542, 8.507059e+37
    %v544 = vand.u32 %v517, 2147483648
    %v545 = vor.u32 1.1754944e-38, %v544
    %v546 = vsel %vm543, %v545, %v541
    %v547 = vmul.f32 1.0, %v546
    %v550 = vrot.slane %v547, 7
    %vm551 = vcmask 1040384
    %v552 = vsel %vm551, %v532, %v550
    %v553 = vsel %vm199, %v532, %v550
    %v554 = vrot.slane %v553, 1
    %v555 = vperm.slane %v552, 0
    %v556 = vperm.slane %v552, 1
    %v557 = vperm.slane %v554, 0
    %v558 = vperm.slane %v554, 1
    %v559 = vrot.slane %v556, 4
    %v560 = vrot.slane %v558, 4
    %v561 = vsel %vm56, %v555, %v559
    %v562 = vsel %vm56, %v557, %v560
    %v565 = vmul.f32 %v41, %v561
    %v566 = vmul.f32 %v42, %v562
    %567 = vst [vmem:[#allocation7] sm:$0xff] %v565
    %568 = vst [vmem:[#allocation7 + $0x8] sm:$0xff] %v566
    // Predicated region
    $region18: #{tpu_custom_call.1} parent=1 // pred_check
      _
    $region19: #{tpu_custom_call.1} parent=1 // pred_check_branch
      %570 = sbr.rel (0) target = $region21
    $region20: #{tpu_custom_call.1} parent=1 // pred_region
      %572 = vsyncadd [#allocation4], 0
      %s573 = sshll.u32 [#allocation7], 4
      %s574 = int_to_ptr.vmem [resolvable:$true] %s573
      %s575 = sshll.u32 %s2, 4
      %s576 = int_to_ptr.hbm [resolvable:$true] %s575
      %581 = dma.vmem_to_hbm [thread:$0]  %s574, 256, %s576, [#allocation4], 128, 128, 8
    $region21: #{tpu_custom_call.1} parent=1 // pred_fallthru
      _
    // Predicated region
    $region22: #{tpu_custom_call.1} parent=1 // pred_check
      _
    $region23: #{tpu_custom_call.1} parent=1 // pred_check_branch
      %583 = sbr.rel (0) target = $region25
    $region24: #{tpu_custom_call.1} parent=1 // pred_region
      %585 = dma.done [#allocation4], 256
    $region25: #{tpu_custom_call.1} parent=1 // pred_fallthru
      _
    %586 = vsyncpa [#allocation3], 1
    %587 = vsyncpa [#allocation4], 1
    %588 = vsyncpa [#allocation5], 1

</llo_original>
